<compile_context>
chip_gen: v7x
topology: tpu7x:2x2x1
jax: 0.10.0
libtpu: 0.0.40
codegen_flags: <defaults>
</compile_context>

<pallas_src>
import functools

import jax
import jax.numpy as jnp
from jax import lax
from jax.experimental import pallas as pl
from jax.experimental.pallas import tpu as pltpu


def mha_kernel(q_ref, k_ref, v_ref, wq_ref, wk_ref, wv_ref, wo_ref, o_ref,
               *, h, d_k, d_v):
    """One grid step = (batch element, query tile). All-head projections are fused into
    lane-dense matmuls; only the score/softmax/context part loops over heads."""
    # bf16 MXU operands, f32 accumulation; softmax math stays f32 (v5e-safe).
    q = q_ref[0].astype(jnp.bfloat16)          # (TQ, d_model)
    k = k_ref[0].astype(jnp.bfloat16)          # (S,  d_model)
    v = v_ref[0].astype(jnp.bfloat16)          # (S,  d_model)
    wq = wq_ref[...].astype(jnp.bfloat16)      # (d_model, h*d_k)
    wk = wk_ref[...].astype(jnp.bfloat16)      # (d_model, h*d_k)
    wv = wv_ref[...].astype(jnp.bfloat16)      # (d_model, h*d_v)
    wo = wo_ref[...].astype(jnp.bfloat16)      # (h*d_v, d_model)

    # Fused-head projections (single lane-dense MXU pass each).
    qh_all = jnp.dot(q, wq, preferred_element_type=jnp.float32)   # (TQ, h*d_k)
    kh_all = jnp.dot(k, wk, preferred_element_type=jnp.float32)   # (S,  h*d_k)
    vh_all = jnp.dot(v, wv, preferred_element_type=jnp.float32)   # (S,  h*d_v)

    scale = 1.0 / jnp.sqrt(jnp.float32(d_k))

    ctx_heads = []
    for head in range(h):                      # static, small (h=4)
        qh = qh_all[:, head * d_k:(head + 1) * d_k].astype(jnp.bfloat16)  # (TQ, d_k)
        kh = kh_all[:, head * d_k:(head + 1) * d_k].astype(jnp.bfloat16)  # (S,  d_k)
        vh = vh_all[:, head * d_v:(head + 1) * d_v].astype(jnp.bfloat16)  # (S,  d_v)

        # Fold the K transpose into the contraction (no materialized kh.T).
        scores = lax.dot_general(
            qh, kh, dimension_numbers=(((1,), (1,)), ((), ())),
            preferred_element_type=jnp.float32) * scale                   # (TQ, S) f32

        m = jnp.max(scores, axis=-1, keepdims=True)
        p = jnp.exp(scores - m)
        denom = jnp.sum(p, axis=-1, keepdims=True)
        attn = p * pl.reciprocal(denom, approx=True)                      # EUP, not VALU div

        ctx_heads.append(
            jnp.dot(attn.astype(jnp.bfloat16), vh,
                    preferred_element_type=jnp.float32))                  # (TQ, d_v)

    ctx_all = jnp.concatenate(ctx_heads, axis=-1).astype(jnp.bfloat16)    # (TQ, h*d_v)

    # Single fused output projection (equivalent to summing per-head ctx @ Wo_h).
    o_ref[0] = jnp.dot(ctx_all, wo,
                       preferred_element_type=jnp.float32).astype(o_ref.dtype)


def _pick_q_tile(S):
    for cand in (512, 256, 128):
        if S % cand == 0:
            return cand
    return S


def multi_head_attention(Q, K, V, Wq, Wk, Wv, Wo):
    """Q/K/V: [B, S, d_model]; Wq/Wk: [h, d_model, d_k]; Wv: [h, d_model, d_v];
    Wo: [h, d_v, d_model]."""
    B, S, d_model = Q.shape
    h, _, d_k = Wq.shape
    d_v = Wv.shape[-1]

    # Fuse heads into lane-dense weight matrices (done once, outside the kernel).
    Wq_all = jnp.transpose(Wq, (1, 0, 2)).reshape(d_model, h * d_k)
    Wk_all = jnp.transpose(Wk, (1, 0, 2)).reshape(d_model, h * d_k)
    Wv_all = jnp.transpose(Wv, (1, 0, 2)).reshape(d_model, h * d_v)
    Wo_all = Wo.reshape(h * d_v, d_model)

    tq = _pick_q_tile(S)
    grid = (B, S // tq)

    kernel = functools.partial(mha_kernel, h=h, d_k=d_k, d_v=d_v)
    return pl.pallas_call(
        kernel,
        out_shape=jax.ShapeDtypeStruct((B, S, d_model), Q.dtype),
        grid_spec=pltpu.PrefetchScalarGridSpec(
            num_scalar_prefetch=0,
            grid=grid,
            in_specs=[
                pl.BlockSpec((1, tq, d_model), lambda b, qi: (b, qi, 0)),  # Q tile
                pl.BlockSpec((1, S, d_model), lambda b, qi: (b, 0, 0)),    # K (full S)
                pl.BlockSpec((1, S, d_model), lambda b, qi: (b, 0, 0)),    # V (full S)
                pl.BlockSpec((d_model, h * d_k), lambda b, qi: (0, 0)),    # Wq (resident)
                pl.BlockSpec((d_model, h * d_k), lambda b, qi: (0, 0)),    # Wk (resident)
                pl.BlockSpec((d_model, h * d_v), lambda b, qi: (0, 0)),    # Wv (resident)
                pl.BlockSpec((h * d_v, d_model), lambda b, qi: (0, 0)),    # Wo (resident)
            ],
            out_specs=pl.BlockSpec((1, tq, d_model), lambda b, qi: (b, qi, 0)),
        ),
        compiler_params=pltpu.CompilerParams(
            dimension_semantics=("parallel", "parallel"),
            vmem_limit_bytes=64 * 1024 * 1024),
    )(Q, K, V, Wq_all, Wk_all, Wv_all, Wo_all)


def mha_reference(Q, K, V, Wq, Wk, Wv, Wo):
    """Pure-JAX f32 reference for validation."""
    d_k = Wq.shape[-1]
    qh = jnp.einsum("bsm,hmk->bhsk", Q, Wq)
    kh = jnp.einsum("bsm,hmk->bhsk", K, Wk)
    vh = jnp.einsum("bsm,hmv->bhsv", V, Wv)
    scores = jnp.einsum("bhqk,bhsk->bhqs", qh, kh) / jnp.sqrt(jnp.float32(d_k))
    attn = jax.nn.softmax(scores, axis=-1)
    ctx = jnp.einsum("bhqs,bhsv->bhqv", attn, vh)
    return jnp.einsum("bhqv,hvm->bqm", ctx, Wo)


if __name__ == "__main__":
    # Small deterministic shapes consistent with MultiHeadAttention(d_k, d_v, d_model, h=4).
    B, S, d_model, h = 2, 8, 32, 4
    d_k, d_v = 8, 8

    key = jax.random.PRNGKey(0)
    kq, kk, kv, kwq, kwk, kwv, kwo = jax.random.split(key, 7)

    Q = jax.random.normal(kq, (B, S, d_model), dtype=jnp.float32)
    K = jax.random.normal(kk, (B, S, d_model), dtype=jnp.float32)
    V = jax.random.normal(kv, (B, S, d_model), dtype=jnp.float32)

    # Deterministic parameter init (Glorot-ish scaling).
    Wq = jax.random.normal(kwq, (h, d_model, d_k), dtype=jnp.float32) / jnp.sqrt(d_model)
    Wk = jax.random.normal(kwk, (h, d_model, d_k), dtype=jnp.float32) / jnp.sqrt(d_model)
    Wv = jax.random.normal(kwv, (h, d_model, d_v), dtype=jnp.float32) / jnp.sqrt(d_model)
    Wo = jax.random.normal(kwo, (h, d_v, d_model), dtype=jnp.float32) / jnp.sqrt(h * d_v)

    out = multi_head_attention(Q, K, V, Wq, Wk, Wv, Wo)
    out = jax.block_until_ready(out)

    ref = mha_reference(Q, K, V, Wq, Wk, Wv, Wo)
    assert out.shape == (B, S, d_model)
    # bf16 MXU operands + approx reciprocal -> looser tolerance vs f32 reference.
    assert jnp.allclose(out, ref, atol=5e-2, rtol=5e-2), "mismatch vs JAX reference"

    print("KERNEL_OK")
</pallas_src>

<mosaic_0001>
module attributes {stable_mosaic.version = 11 : i64} {
  func.func @mha_kernel(%arg0: i32, %arg1: i32, %arg2: memref<1x8x32xf32, #tpu.memory_space<vmem>>, %arg3: memref<1x8x32xf32, #tpu.memory_space<vmem>>, %arg4: memref<1x8x32xf32, #tpu.memory_space<vmem>>, %arg5: memref<32x32xf32, #tpu.memory_space<vmem>>, %arg6: memref<32x32xf32, #tpu.memory_space<vmem>>, %arg7: memref<32x32xf32, #tpu.memory_space<vmem>>, %arg8: memref<32x32xf32, #tpu.memory_space<vmem>>, %arg9: memref<1x8x32xf32, #tpu.memory_space<vmem>>) attributes {dimension_semantics = [#tpu.dimension_semantics<parallel>, #tpu.dimension_semantics<parallel>], iteration_bounds = array<i64: 2, 1>, scalar_prefetch = 0 : i64, scratch_operands = 0 : i64, tpu.core_type = #tpu.core_type<tc>, window_params = [{transform_indices = @transform_0, window_bounds = array<i64: 1, 8, 32>}, {transform_indices = @transform_1, window_bounds = array<i64: 1, 8, 32>}, {transform_indices = @transform_2, window_bounds = array<i64: 1, 8, 32>}, {pipeline_mode = #tpu.pipeline_mode<synchronous>, transform_indices = @transform_3, window_bounds = array<i64: 32, 32>}, {pipeline_mode = #tpu.pipeline_mode<synchronous>, transform_indices = @transform_4, window_bounds = array<i64: 32, 32>}, {pipeline_mode = #tpu.pipeline_mode<synchronous>, transform_indices = @transform_5, window_bounds = array<i64: 32, 32>}, {pipeline_mode = #tpu.pipeline_mode<synchronous>, transform_indices = @transform_6, window_bounds = array<i64: 32, 32>}, {transform_indices = @transform_7, window_bounds = array<i64: 1, 8, 32>}]} {
    %c0 = arith.constant 0 : index
    %c0_0 = arith.constant 0 : index
    %c0_1 = arith.constant 0 : index
    %0 = vector.load %arg2[%c0, %c0_0, %c0_1] : memref<1x8x32xf32, #tpu.memory_space<vmem>>, vector<1x8x32xf32>
    %1 = vector.shape_cast %0 : vector<1x8x32xf32> to vector<8x32xf32>
    %2 = arith.truncf %1 : vector<8x32xf32> to vector<8x32xbf16>
    %c0_2 = arith.constant 0 : index
    %c0_3 = arith.constant 0 : index
    %c0_4 = arith.constant 0 : index
    %3 = vector.load %arg3[%c0_2, %c0_3, %c0_4] : memref<1x8x32xf32, #tpu.memory_space<vmem>>, vector<1x8x32xf32>
    %4 = vector.shape_cast %3 : vector<1x8x32xf32> to vector<8x32xf32>
    %5 = arith.truncf %4 : vector<8x32xf32> to vector<8x32xbf16>
    %c0_5 = arith.constant 0 : index
    %c0_6 = arith.constant 0 : index
    %c0_7 = arith.constant 0 : index
    %6 = vector.load %arg4[%c0_5, %c0_6, %c0_7] : memref<1x8x32xf32, #tpu.memory_space<vmem>>, vector<1x8x32xf32>
    %7 = vector.shape_cast %6 : vector<1x8x32xf32> to vector<8x32xf32>
    %8 = arith.truncf %7 : vector<8x32xf32> to vector<8x32xbf16>
    %c0_8 = arith.constant 0 : index
    %c0_9 = arith.constant 0 : index
    %9 = vector.load %arg5[%c0_8, %c0_9] : memref<32x32xf32, #tpu.memory_space<vmem>>, vector<32x32xf32>
    %10 = arith.truncf %9 : vector<32x32xf32> to vector<32x32xbf16>
    %c0_10 = arith.constant 0 : index
    %c0_11 = arith.constant 0 : index
    %11 = vector.load %arg6[%c0_10, %c0_11] : memref<32x32xf32, #tpu.memory_space<vmem>>, vector<32x32xf32>
    %12 = arith.truncf %11 : vector<32x32xf32> to vector<32x32xbf16>
    %c0_12 = arith.constant 0 : index
    %c0_13 = arith.constant 0 : index
    %13 = vector.load %arg7[%c0_12, %c0_13] : memref<32x32xf32, #tpu.memory_space<vmem>>, vector<32x32xf32>
    %14 = arith.truncf %13 : vector<32x32xf32> to vector<32x32xbf16>
    %c0_14 = arith.constant 0 : index
    %c0_15 = arith.constant 0 : index
    %15 = vector.load %arg8[%c0_14, %c0_15] : memref<32x32xf32, #tpu.memory_space<vmem>>, vector<32x32xf32>
    %16 = arith.truncf %15 : vector<32x32xf32> to vector<32x32xbf16>
    %cst = arith.constant dense<0.000000e+00> : vector<8x32xf32>
    %17 = tpu.matmul %2, %10, %cst {dimension_numbers = #tpu.dot_dimension_numbers<[1], [0], [0], [1], [0, 0, 1, 1], [], []>} : vector<8x32xbf16>, vector<32x32xbf16>, vector<8x32xf32> -> vector<8x32xf32>
    %cst_16 = arith.constant dense<0.000000e+00> : vector<8x32xf32>
    %18 = tpu.matmul %5, %12, %cst_16 {dimension_numbers = #tpu.dot_dimension_numbers<[1], [0], [0], [1], [0, 0, 1, 1], [], []>} : vector<8x32xbf16>, vector<32x32xbf16>, vector<8x32xf32> -> vector<8x32xf32>
    %cst_17 = arith.constant dense<0.000000e+00> : vector<8x32xf32>
    %19 = tpu.matmul %8, %14, %cst_17 {dimension_numbers = #tpu.dot_dimension_numbers<[1], [0], [0], [1], [0, 0, 1, 1], [], []>} : vector<8x32xbf16>, vector<32x32xbf16>, vector<8x32xf32> -> vector<8x32xf32>
    %cst_18 = arith.constant 8.000000e+00 : f32
    %20 = math.sqrt %cst_18 : f32
    %cst_19 = arith.constant 1.000000e+00 : f32
    %21 = arith.divf %cst_19, %20 : f32
    %22 = vector.extract_strided_slice %17 {offsets = [0, 0], sizes = [8, 8], strides = [1, 1]} : vector<8x32xf32> to vector<8x8xf32>
    %23 = arith.truncf %22 : vector<8x8xf32> to vector<8x8xbf16>
    %24 = vector.extract_strided_slice %18 {offsets = [0, 0], sizes = [8, 8], strides = [1, 1]} : vector<8x32xf32> to vector<8x8xf32>
    %25 = arith.truncf %24 : vector<8x8xf32> to vector<8x8xbf16>
    %26 = vector.extract_strided_slice %19 {offsets = [0, 0], sizes = [8, 8], strides = [1, 1]} : vector<8x32xf32> to vector<8x8xf32>
    %27 = arith.truncf %26 : vector<8x8xf32> to vector<8x8xbf16>
    %cst_20 = arith.constant dense<0.000000e+00> : vector<8x8xf32>
    %28 = tpu.matmul %23, %25, %cst_20 {dimension_numbers = #tpu.dot_dimension_numbers<[1], [1], [0], [0], [0, 0, 1, 0], [], []>} : vector<8x8xbf16>, vector<8x8xbf16>, vector<8x8xf32> -> vector<8x8xf32>
    %29 = vector.broadcast %21 : f32 to vector<8x8xf32>
    %30 = arith.mulf %28, %29 : vector<8x8xf32>
    %cst_21 = arith.constant dense<0xFF800000> : vector<8xf32>
    %31 = vector.multi_reduction <maximumf>, %30, %cst_21 [1] : vector<8x8xf32> to vector<8xf32>
    %32 = vector.shape_cast %31 : vector<8xf32> to vector<8x1xf32>
    %33 = vector.broadcast %32 : vector<8x1xf32> to vector<8x8xf32>
    %34 = arith.subf %30, %33 : vector<8x8xf32>
    %35 = math.exp %34 : vector<8x8xf32>
    %cst_22 = arith.constant dense<0.000000e+00> : vector<8xf32>
    %36 = vector.multi_reduction <add>, %35, %cst_22 [1] : vector<8x8xf32> to vector<8xf32>
    %37 = vector.shape_cast %36 : vector<8xf32> to vector<8x1xf32>
    %38 = tpu.reciprocal %37 {approx = true} : vector<8x1xf32> -> vector<8x1xf32>
    %39 = vector.broadcast %38 : vector<8x1xf32> to vector<8x8xf32>
    %40 = arith.mulf %35, %39 : vector<8x8xf32>
    %41 = arith.truncf %40 : vector<8x8xf32> to vector<8x8xbf16>
    %cst_23 = arith.constant dense<0.000000e+00> : vector<8x8xf32>
    %42 = tpu.matmul %41, %27, %cst_23 {dimension_numbers = #tpu.dot_dimension_numbers<[1], [0], [0], [1], [0, 0, 1, 1], [], []>} : vector<8x8xbf16>, vector<8x8xbf16>, vector<8x8xf32> -> vector<8x8xf32>
    %43 = vector.extract_strided_slice %17 {offsets = [0, 8], sizes = [8, 8], strides = [1, 1]} : vector<8x32xf32> to vector<8x8xf32>
    %44 = arith.truncf %43 : vector<8x8xf32> to vector<8x8xbf16>
    %45 = vector.extract_strided_slice %18 {offsets = [0, 8], sizes = [8, 8], strides = [1, 1]} : vector<8x32xf32> to vector<8x8xf32>
    %46 = arith.truncf %45 : vector<8x8xf32> to vector<8x8xbf16>
    %47 = vector.extract_strided_slice %19 {offsets = [0, 8], sizes = [8, 8], strides = [1, 1]} : vector<8x32xf32> to vector<8x8xf32>
    %48 = arith.truncf %47 : vector<8x8xf32> to vector<8x8xbf16>
    %cst_24 = arith.constant dense<0.000000e+00> : vector<8x8xf32>
    %49 = tpu.matmul %44, %46, %cst_24 {dimension_numbers = #tpu.dot_dimension_numbers<[1], [1], [0], [0], [0, 0, 1, 0], [], []>} : vector<8x8xbf16>, vector<8x8xbf16>, vector<8x8xf32> -> vector<8x8xf32>
    %50 = vector.broadcast %21 : f32 to vector<8x8xf32>
    %51 = arith.mulf %49, %50 : vector<8x8xf32>
    %cst_25 = arith.constant dense<0xFF800000> : vector<8xf32>
    %52 = vector.multi_reduction <maximumf>, %51, %cst_25 [1] : vector<8x8xf32> to vector<8xf32>
    %53 = vector.shape_cast %52 : vector<8xf32> to vector<8x1xf32>
    %54 = vector.broadcast %53 : vector<8x1xf32> to vector<8x8xf32>
    %55 = arith.subf %51, %54 : vector<8x8xf32>
    %56 = math.exp %55 : vector<8x8xf32>
    %cst_26 = arith.constant dense<0.000000e+00> : vector<8xf32>
    %57 = vector.multi_reduction <add>, %56, %cst_26 [1] : vector<8x8xf32> to vector<8xf32>
    %58 = vector.shape_cast %57 : vector<8xf32> to vector<8x1xf32>
    %59 = tpu.reciprocal %58 {approx = true} : vector<8x1xf32> -> vector<8x1xf32>
    %60 = vector.broadcast %59 : vector<8x1xf32> to vector<8x8xf32>
    %61 = arith.mulf %56, %60 : vector<8x8xf32>
    %62 = arith.truncf %61 : vector<8x8xf32> to vector<8x8xbf16>
    %cst_27 = arith.constant dense<0.000000e+00> : vector<8x8xf32>
    %63 = tpu.matmul %62, %48, %cst_27 {dimension_numbers = #tpu.dot_dimension_numbers<[1], [0], [0], [1], [0, 0, 1, 1], [], []>} : vector<8x8xbf16>, vector<8x8xbf16>, vector<8x8xf32> -> vector<8x8xf32>
    %64 = vector.extract_strided_slice %17 {offsets = [0, 16], sizes = [8, 8], strides = [1, 1]} : vector<8x32xf32> to vector<8x8xf32>
    %65 = arith.truncf %64 : vector<8x8xf32> to vector<8x8xbf16>
    %66 = vector.extract_strided_slice %18 {offsets = [0, 16], sizes = [8, 8], strides = [1, 1]} : vector<8x32xf32> to vector<8x8xf32>
    %67 = arith.truncf %66 : vector<8x8xf32> to vector<8x8xbf16>
    %68 = vector.extract_strided_slice %19 {offsets = [0, 16], sizes = [8, 8], strides = [1, 1]} : vector<8x32xf32> to vector<8x8xf32>
    %69 = arith.truncf %68 : vector<8x8xf32> to vector<8x8xbf16>
    %cst_28 = arith.constant dense<0.000000e+00> : vector<8x8xf32>
    %70 = tpu.matmul %65, %67, %cst_28 {dimension_numbers = #tpu.dot_dimension_numbers<[1], [1], [0], [0], [0, 0, 1, 0], [], []>} : vector<8x8xbf16>, vector<8x8xbf16>, vector<8x8xf32> -> vector<8x8xf32>
    %71 = vector.broadcast %21 : f32 to vector<8x8xf32>
    %72 = arith.mulf %70, %71 : vector<8x8xf32>
    %cst_29 = arith.constant dense<0xFF800000> : vector<8xf32>
    %73 = vector.multi_reduction <maximumf>, %72, %cst_29 [1] : vector<8x8xf32> to vector<8xf32>
    %74 = vector.shape_cast %73 : vector<8xf32> to vector<8x1xf32>
    %75 = vector.broadcast %74 : vector<8x1xf32> to vector<8x8xf32>
    %76 = arith.subf %72, %75 : vector<8x8xf32>
    %77 = math.exp %76 : vector<8x8xf32>
    %cst_30 = arith.constant dense<0.000000e+00> : vector<8xf32>
    %78 = vector.multi_reduction <add>, %77, %cst_30 [1] : vector<8x8xf32> to vector<8xf32>
    %79 = vector.shape_cast %78 : vector<8xf32> to vector<8x1xf32>
    %80 = tpu.reciprocal %79 {approx = true} : vector<8x1xf32> -> vector<8x1xf32>
    %81 = vector.broadcast %80 : vector<8x1xf32> to vector<8x8xf32>
    %82 = arith.mulf %77, %81 : vector<8x8xf32>
    %83 = arith.truncf %82 : vector<8x8xf32> to vector<8x8xbf16>
    %cst_31 = arith.constant dense<0.000000e+00> : vector<8x8xf32>
    %84 = tpu.matmul %83, %69, %cst_31 {dimension_numbers = #tpu.dot_dimension_numbers<[1], [0], [0], [1], [0, 0, 1, 1], [], []>} : vector<8x8xbf16>, vector<8x8xbf16>, vector<8x8xf32> -> vector<8x8xf32>
    %85 = vector.extract_strided_slice %17 {offsets = [0, 24], sizes = [8, 8], strides = [1, 1]} : vector<8x32xf32> to vector<8x8xf32>
    %86 = arith.truncf %85 : vector<8x8xf32> to vector<8x8xbf16>
    %87 = vector.extract_strided_slice %18 {offsets = [0, 24], sizes = [8, 8], strides = [1, 1]} : vector<8x32xf32> to vector<8x8xf32>
    %88 = arith.truncf %87 : vector<8x8xf32> to vector<8x8xbf16>
    %89 = vector.extract_strided_slice %19 {offsets = [0, 24], sizes = [8, 8], strides = [1, 1]} : vector<8x32xf32> to vector<8x8xf32>
    %90 = arith.truncf %89 : vector<8x8xf32> to vector<8x8xbf16>
    %cst_32 = arith.constant dense<0.000000e+00> : vector<8x8xf32>
    %91 = tpu.matmul %86, %88, %cst_32 {dimension_numbers = #tpu.dot_dimension_numbers<[1], [1], [0], [0], [0, 0, 1, 0], [], []>} : vector<8x8xbf16>, vector<8x8xbf16>, vector<8x8xf32> -> vector<8x8xf32>
    %92 = vector.broadcast %21 : f32 to vector<8x8xf32>
    %93 = arith.mulf %91, %92 : vector<8x8xf32>
    %cst_33 = arith.constant dense<0xFF800000> : vector<8xf32>
    %94 = vector.multi_reduction <maximumf>, %93, %cst_33 [1] : vector<8x8xf32> to vector<8xf32>
    %95 = vector.shape_cast %94 : vector<8xf32> to vector<8x1xf32>
    %96 = vector.broadcast %95 : vector<8x1xf32> to vector<8x8xf32>
    %97 = arith.subf %93, %96 : vector<8x8xf32>
    %98 = math.exp %97 : vector<8x8xf32>
    %cst_34 = arith.constant dense<0.000000e+00> : vector<8xf32>
    %99 = vector.multi_reduction <add>, %98, %cst_34 [1] : vector<8x8xf32> to vector<8xf32>
    %100 = vector.shape_cast %99 : vector<8xf32> to vector<8x1xf32>
    %101 = tpu.reciprocal %100 {approx = true} : vector<8x1xf32> -> vector<8x1xf32>
    %102 = vector.broadcast %101 : vector<8x1xf32> to vector<8x8xf32>
    %103 = arith.mulf %98, %102 : vector<8x8xf32>
    %104 = arith.truncf %103 : vector<8x8xf32> to vector<8x8xbf16>
    %cst_35 = arith.constant dense<0.000000e+00> : vector<8x8xf32>
    %105 = tpu.matmul %104, %90, %cst_35 {dimension_numbers = #tpu.dot_dimension_numbers<[1], [0], [0], [1], [0, 0, 1, 1], [], []>} : vector<8x8xbf16>, vector<8x8xbf16>, vector<8x8xf32> -> vector<8x8xf32>
    %106 = tpu.concatenate %42, %63, %84, %105 in 1 : vector<8x8xf32>, vector<8x8xf32>, vector<8x8xf32>, vector<8x8xf32> -> vector<8x32xf32>
    %107 = arith.truncf %106 : vector<8x32xf32> to vector<8x32xbf16>
    %cst_36 = arith.constant dense<0.000000e+00> : vector<8x32xf32>
    %108 = tpu.matmul %107, %16, %cst_36 {dimension_numbers = #tpu.dot_dimension_numbers<[1], [0], [0], [1], [0, 0, 1, 1], [], []>} : vector<8x32xbf16>, vector<32x32xbf16>, vector<8x32xf32> -> vector<8x32xf32>
    %c0_37 = arith.constant 0 : index
    %c0_38 = arith.constant 0 : index
    %c0_39 = arith.constant 0 : index
    %109 = vector.load %arg9[%c0_37, %c0_38, %c0_39] : memref<1x8x32xf32, #tpu.memory_space<vmem>>, vector<1x8x32xf32>
    %110 = vector.shape_cast %109 : vector<1x8x32xf32> to vector<8x32xf32>
    %111 = vector.shape_cast %108 : vector<8x32xf32> to vector<1x8x32xf32>
    tpu.vector_store %arg9[%c0_37, %c0_38, %c0_39], %111 {strides = array<i32>} : memref<1x8x32xf32, #tpu.memory_space<vmem>>, vector<1x8x32xf32>,
    return
  }
  func.func @transform_0(%arg0: i32, %arg1: i32) -> (i32, i32, i32) {
    %c0_i32 = arith.constant 0 : i32
    %c0_i32_0 = arith.constant 0 : i32
    return %arg0, %arg1, %c0_i32 : i32, i32, i32
  }
  func.func @transform_1(%arg0: i32, %arg1: i32) -> (i32, i32, i32) {
    %c0_i32 = arith.constant 0 : i32
    %c0_i32_0 = arith.constant 0 : i32
    %c0_i32_1 = arith.constant 0 : i32
    return %arg0, %c0_i32, %c0_i32_0 : i32, i32, i32
  }
  func.func @transform_2(%arg0: i32, %arg1: i32) -> (i32, i32, i32) {
    %c0_i32 = arith.constant 0 : i32
    %c0_i32_0 = arith.constant 0 : i32
    %c0_i32_1 = arith.constant 0 : i32
    return %arg0, %c0_i32, %c0_i32_0 : i32, i32, i32
  }
  func.func @transform_3(%arg0: i32, %arg1: i32) -> (i32, i32) {
    %c0_i32 = arith.constant 0 : i32
    %c0_i32_0 = arith.constant 0 : i32
    %c0_i32_1 = arith.constant 0 : i32
    return %c0_i32, %c0_i32_0 : i32, i32
  }
  func.func @transform_4(%arg0: i32, %arg1: i32) -> (i32, i32) {
    %c0_i32 = arith.constant 0 : i32
    %c0_i32_0 = arith.constant 0 : i32
    %c0_i32_1 = arith.constant 0 : i32
    return %c0_i32, %c0_i32_0 : i32, i32
  }
  func.func @transform_5(%arg0: i32, %arg1: i32) -> (i32, i32) {
    %c0_i32 = arith.constant 0 : i32
    %c0_i32_0 = arith.constant 0 : i32
    %c0_i32_1 = arith.constant 0 : i32
    return %c0_i32, %c0_i32_0 : i32, i32
  }
  func.func @transform_6(%arg0: i32, %arg1: i32) -> (i32, i32) {
    %c0_i32 = arith.constant 0 : i32
    %c0_i32_0 = arith.constant 0 : i32
    %c0_i32_1 = arith.constant 0 : i32
    return %c0_i32, %c0_i32_0 : i32, i32
  }
  func.func @transform_7(%arg0: i32, %arg1: i32) -> (i32, i32, i32) {
    %c0_i32 = arith.constant 0 : i32
    %c0_i32_0 = arith.constant 0 : i32
    return %arg0, %arg1, %c0_i32 : i32, i32, i32
  }
}

</mosaic_0001>

<llo_original>
// kernel: tpu_custom_call.1
$region0: #{tpu_custom_call.1}
  #allocation0 [shape = 'u32[]', space=smem, size = 0x4, offset = 0x4, fixed_abs, tag = 'smem constant byte address 0x4 - core index']
  #allocation1 [shape = 'u32[144,128]{1,0:T(1,128)}', space=vmem, size = 0x12000, scoped, tag = 'internal scratch']
  %s0 = inlined_call_operand.hbm [shape: f32[2,8,32], index: 0, kind: input, shape index: {}]
  %s1 = inlined_call_operand.hbm [shape: f32[2,8,32], index: 1, kind: input, shape index: {}]
  %s2 = inlined_call_operand.hbm [shape: f32[2,8,32], index: 2, kind: input, shape index: {}]
  %s3 = inlined_call_operand.hbm [shape: f32[32,32], index: 3, kind: input, shape index: {}]
  %s4 = inlined_call_operand.hbm [shape: f32[32,32], index: 4, kind: input, shape index: {}]
  %s5 = inlined_call_operand.hbm [shape: f32[32,32], index: 5, kind: input, shape index: {}]
  %s6 = inlined_call_operand.hbm [shape: f32[32,32], index: 6, kind: input, shape index: {}]
  %s7 = inlined_call_operand.hbm [shape: f32[2,8,32], index: 7, kind: output, shape index: {}]
  %s8 = sld [smem:[#allocation0]]
  $region89: #{tpu_custom_call.1} parent=0
    _
  %s10 = ssub.s32 1, %s8
  %s11 = scalar_select 0, %s10, %s8
  $region1: #{tpu_custom_call.1} parent=0
    #allocation2 [shape = 'u8[8192]{0}', space=vmem, size = 0x2000, scoped, tag = 'input window, operand 0']
    #allocation3 [shape = 's32[2]{0}', space=sflag, size = 0x8, scoped, tag = 'scoped memory for tpu_custom_call.1']
    #allocation4 [shape = 's32[2]{0}', space=sflag, size = 0x8, scoped, tag = 'scoped memory for tpu_custom_call.1']
    #allocation5 [shape = 'u8[8192]{0}', space=vmem, size = 0x2000, scoped, tag = 'input window, operand 1']
    #allocation6 [shape = 's32[2]{0}', space=sflag, size = 0x8, scoped, tag = 'scoped memory for tpu_custom_call.1']
    #allocation7 [shape = 'u8[8192]{0}', space=vmem, size = 0x2000, scoped, tag = 'input window, operand 2']
    #allocation8 [shape = 'u8[16384]{0}', space=vmem, size = 0x4000, scoped, tag = 'input window, operand 3, single buffered']
    #allocation9 [shape = 's32[1]{0}', space=sflag, size = 0x4, scoped, tag = 'scoped memory for tpu_custom_call.1']
    #allocation10 [shape = 'u8[16384]{0}', space=vmem, size = 0x4000, scoped, tag = 'input window, operand 4, single buffered']
    #allocation11 [shape = 'u8[16384]{0}', space=vmem, size = 0x4000, scoped, tag = 'input window, operand 5, single buffered']
    #allocation12 [shape = 's32[1]{0}', space=sflag, size = 0x4, scoped, tag = 'scoped memory for tpu_custom_call.1']
    #allocation13 [shape = 'u8[16384]{0}', space=vmem, size = 0x4000, scoped, tag = 'input window, operand 6, single buffered']
    #allocation14 [shape = 'u8[8192]{0}', space=vmem, size = 0x2000, scoped, tag = 'output window, operand 0']
    %12 = vsyncpa [#allocation3], 0
    %s13 = scalar_lea.sflag [#allocation3], 1
    %14 = vsyncpa %s13, 0
    %15 = vsyncpa [#allocation6], 0
    %s16 = scalar_lea.sflag [#allocation6], 1
    %17 = vsyncpa %s16, 0
    %18 = vsyncpa [#allocation9], 0
    %19 = vsyncpa [#allocation12], 0
    %20 = vsyncpa [#allocation4], 0
    %s21 = scalar_lea.sflag [#allocation4], 1
    %22 = vsyncpa %s21, 0
    loop: start=0, step=1, limit=4
    $region2: #{tpu_custom_call.1} parent=1 // loop_pre_header
      _
    $region3: #{tpu_custom_call.1} parent=1 // loop_header
      %s24 = sphi 0, %s28
      %p25 = scmp.ge.s32.totalorder %s24, 4
      %s31 = sphi 0, %s43
      %s32 = sphi 0, %s39
      %s33 = sphi 0, %s31
      %s34 = sphi 0, %s32
      %s35 = sphi 0, %s33
      %s36 = sphi 0, %s34
      %s48 = sphi 0, %s50
      %s51 = sphi 0, %s48
      %s52 = sphi 0, %s51
      %s68 = sphi 0, %s52
      %s74 = sphi 0, %s76
      %s77 = sphi 0, %s74
      %s78 = sphi 0, %s77
      %s94 = sphi 0, %s78
      %s100 = sphi 0, %s102
      %s103 = sphi 0, %s100
      %s104 = sphi 0, %s103
      %s120 = sphi 0, %s104
      %s124 = sphi 0, %s124
      %s126 = sphi 0, %s124
      %s127 = sphi 0, %s126
      %s141 = sphi 0, %s127
      %s145 = sphi 0, %s145
      %s147 = sphi 0, %s145
      %s148 = sphi 0, %s147
      %s162 = sphi 0, %s148
      %s166 = sphi 0, %s166
      %s168 = sphi 0, %s166
      %s169 = sphi 0, %s168
      %s183 = sphi 0, %s169
      %s187 = sphi 0, %s187
      %s189 = sphi 0, %s187
      %s190 = sphi 0, %s189
      %s204 = sphi 0, %s190
      %s212 = sphi 0, %s214
      %s215 = sphi 0, %s212
      %s216 = sphi 0, %s215
      %s232 = sphi 0, %s216
    $region4: #{tpu_custom_call.1} parent=1 // loop_header_branch
      %27 = sbr.rel (%p25) target = $region8
    $region5: #{tpu_custom_call.1} parent=1 // loop_body
      %s29 = ssub.s32 %s24, 1
      %s30 = ssub.s32 %s24, 2
      %s37 = sadd.s32 1, %s32
      %p38 = scmp.ge.s32.totalorder %s37, 1
      %s39 = scalar_select %p38, 0, %s37
      %s40 = sadd.s32 1, %s31
      %s41 = scalar_select %p38, %s40, %s31
      %p42 = scmp.ge.s32.totalorder %s41, 2
      %s43 = scalar_select %p42, 0, %s41
      %s44 = ssub.s32 %s31, %s43
      %s45 = ssub.s32 %s32, %s39
      %s46 = sor.u32 %s44, %s45
      %p47 = scmp.eq.s32.totalorder %s46, 0
      %s49 = sadd.s32 %s48, 1
      %s50 = scalar_select %p47, %s48, %s49
      %p53 = pneg %p47
      %p54 = scmp.eq.s32.totalorder %s24, 1
      %p55 = por %p53, %p54
      %p56 = scmp.ne.s32.totalorder %s48, %s51
      %p57 = scmp.eq.s32.totalorder %s24, 0
      %p58 = por %p56, %p57
      %p59 = scmp.ne.s32.totalorder %s48, %s51
      %p60 = scmp.eq.s32.totalorder %s29, 1
      %p61 = por %p59, %p60
      %p62 = scmp.ne.s32.totalorder %s51, %s52
      %p63 = scmp.eq.s32.totalorder %s29, 0
      %p64 = por %p62, %p63
      %p65 = scmp.ne.s32.totalorder %s51, %s52
      %p66 = scmp.eq.s32.totalorder %s30, 1
      %p67 = por %p65, %p66
      %p69 = scmp.ne.s32.totalorder %s52, %s68
      %p70 = scmp.eq.s32.totalorder %s30, 0
      %p71 = por %p69, %p70
      %s72 = ssub.s32 %s31, %s43
      %p73 = scmp.eq.s32.totalorder %s72, 0
      %s75 = sadd.s32 %s74, 1
      %s76 = scalar_select %p73, %s74, %s75
      %p79 = pneg %p73
      %p80 = scmp.eq.s32.totalorder %s24, 1
      %p81 = por %p79, %p80
      %p82 = scmp.ne.s32.totalorder %s74, %s77
      %p83 = scmp.eq.s32.totalorder %s24, 0
      %p84 = por %p82, %p83
      %p85 = scmp.ne.s32.totalorder %s74, %s77
      %p86 = scmp.eq.s32.totalorder %s29, 1
      %p87 = por %p85, %p86
      %p88 = scmp.ne.s32.totalorder %s77, %s78
      %p89 = scmp.eq.s32.totalorder %s29, 0
      %p90 = por %p88, %p89
      %p91 = scmp.ne.s32.totalorder %s77, %s78
      %p92 = scmp.eq.s32.totalorder %s30, 1
      %p93 = por %p91, %p92
      %p95 = scmp.ne.s32.totalorder %s78, %s94
      %p96 = scmp.eq.s32.totalorder %s30, 0
      %p97 = por %p95, %p96
      %s98 = ssub.s32 %s31, %s43
      %p99 = scmp.eq.s32.totalorder %s98, 0
      %s101 = sadd.s32 %s100, 1
      %s102 = scalar_select %p99, %s100, %s101
      %p105 = pneg %p99
      %p106 = scmp.eq.s32.totalorder %s24, 1
      %p107 = por %p105, %p106
      %p108 = scmp.ne.s32.totalorder %s100, %s103
      %p109 = scmp.eq.s32.totalorder %s24, 0
      %p110 = por %p108, %p109
      %p111 = scmp.ne.s32.totalorder %s100, %s103
      %p112 = scmp.eq.s32.totalorder %s29, 1
      %p113 = por %p111, %p112
      %p114 = scmp.ne.s32.totalorder %s103, %s104
      %p115 = scmp.eq.s32.totalorder %s29, 0
      %p116 = por %p114, %p115
      %p117 = scmp.ne.s32.totalorder %s103, %s104
      %p118 = scmp.eq.s32.totalorder %s30, 1
      %p119 = por %p117, %p118
      %p121 = scmp.ne.s32.totalorder %s104, %s120
      %p122 = scmp.eq.s32.totalorder %s30, 0
      %p123 = por %p121, %p122
      %s125 = sadd.s32 %s124, 1
      %p128 = scmp.eq.s32.totalorder %s24, 1
      %p129 = scmp.ne.s32.totalorder %s124, %s126
      %p130 = scmp.eq.s32.totalorder %s24, 0
      %p131 = por %p129, %p130
      %p132 = scmp.ne.s32.totalorder %s124, %s126
      %p133 = scmp.eq.s32.totalorder %s29, 1
      %p134 = por %p132, %p133
      %p135 = scmp.ne.s32.totalorder %s126, %s127
      %p136 = scmp.eq.s32.totalorder %s29, 0
      %p137 = por %p135, %p136
      %p138 = scmp.ne.s32.totalorder %s126, %s127
      %p139 = scmp.eq.s32.totalorder %s30, 1
      %p140 = por %p138, %p139
      %p142 = scmp.ne.s32.totalorder %s127, %s141
      %p143 = scmp.eq.s32.totalorder %s30, 0
      %p144 = por %p142, %p143
      %s146 = sadd.s32 %s145, 1
      %p149 = scmp.eq.s32.totalorder %s24, 1
      %p150 = scmp.ne.s32.totalorder %s145, %s147
      %p151 = scmp.eq.s32.totalorder %s24, 0
      %p152 = por %p150, %p151
      %p153 = scmp.ne.s32.totalorder %s145, %s147
      %p154 = scmp.eq.s32.totalorder %s29, 1
      %p155 = por %p153, %p154
      %p156 = scmp.ne.s32.totalorder %s147, %s148
      %p157 = scmp.eq.s32.totalorder %s29, 0
      %p158 = por %p156, %p157
      %p159 = scmp.ne.s32.totalorder %s147, %s148
      %p160 = scmp.eq.s32.totalorder %s30, 1
      %p161 = por %p159, %p160
      %p163 = scmp.ne.s32.totalorder %s148, %s162
      %p164 = scmp.eq.s32.totalorder %s30, 0
      %p165 = por %p163, %p164
      %s167 = sadd.s32 %s166, 1
      %p170 = scmp.eq.s32.totalorder %s24, 1
      %p171 = scmp.ne.s32.totalorder %s166, %s168
      %p172 = scmp.eq.s32.totalorder %s24, 0
      %p173 = por %p171, %p172
      %p174 = scmp.ne.s32.totalorder %s166, %s168
      %p175 = scmp.eq.s32.totalorder %s29, 1
      %p176 = por %p174, %p175
      %p177 = scmp.ne.s32.totalorder %s168, %s169
      %p178 = scmp.eq.s32.totalorder %s29, 0
      %p179 = por %p177, %p178
      %p180 = scmp.ne.s32.totalorder %s168, %s169
      %p181 = scmp.eq.s32.totalorder %s30, 1
      %p182 = por %p180, %p181
      %p184 = scmp.ne.s32.totalorder %s169, %s183
      %p185 = scmp.eq.s32.totalorder %s30, 0
      %p186 = por %p184, %p185
      %s188 = sadd.s32 %s187, 1
      %p191 = scmp.eq.s32.totalorder %s24, 1
      %p192 = scmp.ne.s32.totalorder %s187, %s189
      %p193 = scmp.eq.s32.totalorder %s24, 0
      %p194 = por %p192, %p193
      %p195 = scmp.ne.s32.totalorder %s187, %s189
      %p196 = scmp.eq.s32.totalorder %s29, 1
      %p197 = por %p195, %p196
      %p198 = scmp.ne.s32.totalorder %s189, %s190
      %p199 = scmp.eq.s32.totalorder %s29, 0
      %p200 = por %p198, %p199
      %p201 = scmp.ne.s32.totalorder %s189, %s190
      %p202 = scmp.eq.s32.totalorder %s30, 1
      %p203 = por %p201, %p202
      %p205 = scmp.ne.s32.totalorder %s190, %s204
      %p206 = scmp.eq.s32.totalorder %s30, 0
      %p207 = por %p205, %p206
      %s208 = ssub.s32 %s31, %s43
      %s209 = ssub.s32 %s32, %s39
      %s210 = sor.u32 %s208, %s209
      %p211 = scmp.eq.s32.totalorder %s210, 0
      %s213 = sadd.s32 %s212, 1
      %s214 = scalar_select %p211, %s212, %s213
      %p217 = pneg %p211
      %p218 = scmp.eq.s32.totalorder %s24, 1
      %p219 = por %p217, %p218
      %p220 = scmp.ne.s32.totalorder %s212, %s215
      %p221 = scmp.eq.s32.totalorder %s24, 0
      %p222 = por %p220, %p221
      %p223 = scmp.ne.s32.totalorder %s212, %s215
      %p224 = scmp.eq.s32.totalorder %s29, 1
      %p225 = por %p223, %p224
      %p226 = scmp.ne.s32.totalorder %s215, %s216
      %p227 = scmp.eq.s32.totalorder %s29, 0
      %p228 = por %p226, %p227
      %p229 = scmp.ne.s32.totalorder %s215, %s216
      %p230 = scmp.eq.s32.totalorder %s30, 1
      %p231 = por %p229, %p230
      %p233 = scmp.ne.s32.totalorder %s216, %s232
      %p234 = scmp.eq.s32.totalorder %s30, 0
      %p235 = por %p233, %p234
      %p236 = scmp.le.s32.totalorder 1, %s24
      %p237 = scmp.lt.s32.totalorder %s24, 3
      %p238 = pnand %p236, %p237
      %p239 = pneg %p238
      // Predicated region
      $region9: #{tpu_custom_call.1} parent=5 // pred_check
        _
      $region10: #{tpu_custom_call.1} parent=5 // pred_check_branch
        %241 = sbr.rel (%p238) target = $region12
      $region11: #{tpu_custom_call.1} parent=5 // pred_region
        %s242 = ssub.s32 %s24, 1
        // Predicated region
        $region13: #{tpu_custom_call.1} parent=11 // pred_check
          %p243 = pneg %p137
        $region14: #{tpu_custom_call.1} parent=11 // pred_check_branch
          %245 = sbr.rel (%p243) target = $region16
        $region15: #{tpu_custom_call.1} parent=11 // pred_region
          %s247 = ssub.s32 512, 512
          %248 = vsyncadd [#allocation9], %s247
          %s249 = sshll.u32 [#allocation8], 4
          %s250 = int_to_ptr.vmem [resolvable:$true] %s249
          %255 = dma.hbm_to_vmem [thread:$0]  %s3, 512, %s250, [#allocation9], 128, 128, 8
        $region16: #{tpu_custom_call.1} parent=11 // pred_fallthru
          _
        // Predicated region
        $region17: #{tpu_custom_call.1} parent=11 // pred_check
          %p256 = pneg %p158
        $region18: #{tpu_custom_call.1} parent=11 // pred_check_branch
          %258 = sbr.rel (%p256) target = $region20
        $region19: #{tpu_custom_call.1} parent=11 // pred_region
          %s260 = ssub.s32 512, 512
          %261 = vsyncadd [#allocation9], %s260
          %s262 = sshll.u32 [#allocation10], 4
          %s263 = int_to_ptr.vmem [resolvable:$true] %s262
          %268 = dma.hbm_to_vmem [thread:$0]  %s4, 512, %s263, [#allocation9], 128, 128, 8
        $region20: #{tpu_custom_call.1} parent=11 // pred_fallthru
          _
        // Predicated region
        $region21: #{tpu_custom_call.1} parent=11 // pred_check
          %p269 = pneg %p179
        $region22: #{tpu_custom_call.1} parent=11 // pred_check_branch
          %271 = sbr.rel (%p269) target = $region24
        $region23: #{tpu_custom_call.1} parent=11 // pred_region
          %s273 = ssub.s32 512, 512
          %274 = vsyncadd [#allocation12], %s273
          %s275 = sshll.u32 [#allocation11], 4
          %s276 = int_to_ptr.vmem [resolvable:$true] %s275
          %281 = dma.hbm_to_vmem [thread:$0]  %s5, 512, %s276, [#allocation12], 128, 128, 8
        $region24: #{tpu_custom_call.1} parent=11 // pred_fallthru
          _
        // Predicated region
        $region25: #{tpu_custom_call.1} parent=11 // pred_check
          %p282 = pneg %p200
        $region26: #{tpu_custom_call.1} parent=11 // pred_check_branch
          %284 = sbr.rel (%p282) target = $region28
        $region27: #{tpu_custom_call.1} parent=11 // pred_region
          %s286 = ssub.s32 512, 512
          %287 = vsyncadd [#allocation12], %s286
          %s288 = sshll.u32 [#allocation13], 4
          %s289 = int_to_ptr.vmem [resolvable:$true] %s288
          %294 = dma.hbm_to_vmem [thread:$0]  %s6, 512, %s289, [#allocation12], 128, 128, 8
        $region28: #{tpu_custom_call.1} parent=11 // pred_fallthru
          _
      $region12: #{tpu_custom_call.1} parent=5 // pred_fallthru
        _
      %p295 = scmp.lt.s32.totalorder %s24, 2
      // Predicated region
      $region29: #{tpu_custom_call.1} parent=5 // pred_check
        %p296 = pneg %p295
      $region30: #{tpu_custom_call.1} parent=5 // pred_check_branch
        %298 = sbr.rel (%p296) target = $region32
      $region31: #{tpu_custom_call.1} parent=5 // pred_region
        // Predicated region
        $region33: #{tpu_custom_call.1} parent=31 // pred_check
          %p299 = pneg %p58
        $region34: #{tpu_custom_call.1} parent=31 // pred_check_branch
          %301 = sbr.rel (%p299) target = $region36
        $region35: #{tpu_custom_call.1} parent=31 // pred_region
          %s302 = sand.u32 %s48, 1
          %s303 = scalar_lea.sflag [#allocation3], %s302
          %s304 = sand.u32 %s48, 1
          %s305 = smul.addr %s304, 8
          %s306 = scalar_lea.vmem [#allocation2], %s305
          %s308 = ssub.s32 128, 128
          %309 = vsyncadd %s303, %s308
          %s310 = sadd.s32 %s32, %s31
          %s311 = smul.addr %s310, 128
          %s312 = scalar_lea.hbm %s0, %s311
          %s314 = sshll.u32 %s306, 4
          %s315 = int_to_ptr.vmem [resolvable:$true] %s314
          %317 = dma.hbm_to_vmem [thread:$0]  %s312, 128, %s315, %s303
        $region36: #{tpu_custom_call.1} parent=31 // pred_fallthru
          _
        // Predicated region
        $region37: #{tpu_custom_call.1} parent=31 // pred_check
          %p318 = pneg %p84
        $region38: #{tpu_custom_call.1} parent=31 // pred_check_branch
          %320 = sbr.rel (%p318) target = $region40
        $region39: #{tpu_custom_call.1} parent=31 // pred_region
          %s321 = sand.u32 %s24, 1
          %s322 = scalar_lea.sflag [#allocation6], %s321
          %s323 = sand.u32 %s74, 1
          %s324 = smul.addr %s323, 8
          %s325 = scalar_lea.vmem [#allocation5], %s324
          %s327 = ssub.s32 128, 128
          %328 = vsyncadd %s322, %s327
          %s329 = smul.addr %s31, 128
          %s330 = scalar_lea.hbm %s1, %s329
          %s332 = sshll.u32 %s325, 4
          %s333 = int_to_ptr.vmem [resolvable:$true] %s332
          %335 = dma.hbm_to_vmem [thread:$0]  %s330, 128, %s333, %s322
        $region40: #{tpu_custom_call.1} parent=31 // pred_fallthru
          _
        // Predicated region
        $region41: #{tpu_custom_call.1} parent=31 // pred_check
          %p336 = pneg %p110
        $region42: #{tpu_custom_call.1} parent=31 // pred_check_branch
          %338 = sbr.rel (%p336) target = $region44
        $region43: #{tpu_custom_call.1} parent=31 // pred_region
          %s339 = sand.u32 %s24, 1
          %s340 = scalar_lea.sflag [#allocation6], %s339
          %s341 = sand.u32 %s100, 1
          %s342 = smul.addr %s341, 8
          %s343 = scalar_lea.vmem [#allocation7], %s342
          %s345 = ssub.s32 128, 128
          %346 = vsyncadd %s340, %s345
          %s347 = smul.addr %s31, 128
          %s348 = scalar_lea.hbm %s2, %s347
          %s350 = sshll.u32 %s343, 4
          %s351 = int_to_ptr.vmem [resolvable:$true] %s350
          %353 = dma.hbm_to_vmem [thread:$0]  %s348, 128, %s351, %s340
        $region44: #{tpu_custom_call.1} parent=31 // pred_fallthru
          _
      $region32: #{tpu_custom_call.1} parent=5 // pred_fallthru
        _
      %p354 = scmp.le.s32.totalorder 1, %s24
      %p355 = scmp.lt.s32.totalorder %s24, 3
      %p356 = pnand %p354, %p355
      %p357 = pneg %p356
      // Predicated region
      $region45: #{tpu_custom_call.1} parent=5 // pred_check
        _
      $region46: #{tpu_custom_call.1} parent=5 // pred_check_branch
        %359 = sbr.rel (%p356) target = $region48
      $region47: #{tpu_custom_call.1} parent=5 // pred_region
        %s360 = ssub.s32 %s24, 1
        %s361 = sand.u32 %s51, 1
        %s362 = scalar_lea.sflag [#allocation3], %s361
        %s363 = sand.u32 %s51, 1
        %s364 = smul.addr %s363, 8
        %s365 = scalar_lea.vmem [#allocation2], %s364
        // Predicated region
        $region49: #{tpu_custom_call.1} parent=47 // pred_check
          %p366 = pneg %p64
        $region50: #{tpu_custom_call.1} parent=47 // pred_check_branch
          %368 = sbr.rel (%p366) target = $region52
        $region51: #{tpu_custom_call.1} parent=47 // pred_region
          %369 = dma.done %s362, 128
        $region52: #{tpu_custom_call.1} parent=47 // pred_fallthru
          _
        %s370 = sand.u32 %s29, 1
        %s371 = scalar_lea.sflag [#allocation6], %s370
        %s372 = sand.u32 %s77, 1
        %s373 = smul.addr %s372, 8
        %s374 = scalar_lea.vmem [#allocation5], %s373
        // Predicated region
        $region53: #{tpu_custom_call.1} parent=47 // pred_check
          %p375 = pneg %p90
        $region54: #{tpu_custom_call.1} parent=47 // pred_check_branch
          %377 = sbr.rel (%p375) target = $region56
        $region55: #{tpu_custom_call.1} parent=47 // pred_region
          %378 = dma.done %s371, 128
        $region56: #{tpu_custom_call.1} parent=47 // pred_fallthru
          _
        %s379 = sand.u32 %s29, 1
        %s380 = scalar_lea.sflag [#allocation6], %s379
        %s381 = sand.u32 %s103, 1
        %s382 = smul.addr %s381, 8
        %s383 = scalar_lea.vmem [#allocation7], %s382
        // Predicated region
        $region57: #{tpu_custom_call.1} parent=47 // pred_check
          %p384 = pneg %p116
        $region58: #{tpu_custom_call.1} parent=47 // pred_check_branch
          %386 = sbr.rel (%p384) target = $region60
        $region59: #{tpu_custom_call.1} parent=47 // pred_region
          %387 = dma.done %s380, 128
        $region60: #{tpu_custom_call.1} parent=47 // pred_fallthru
          _
        // Predicated region
        $region61: #{tpu_custom_call.1} parent=47 // pred_check
          %p388 = pneg %p137
        $region62: #{tpu_custom_call.1} parent=47 // pred_check_branch
          %390 = sbr.rel (%p388) target = $region64
        $region63: #{tpu_custom_call.1} parent=47 // pred_region
          %391 = dma.done [#allocation9], 512
        $region64: #{tpu_custom_call.1} parent=47 // pred_fallthru
          _
        // Predicated region
        $region65: #{tpu_custom_call.1} parent=47 // pred_check
          %p392 = pneg %p158
        $region66: #{tpu_custom_call.1} parent=47 // pred_check_branch
          %394 = sbr.rel (%p392) target = $region68
        $region67: #{tpu_custom_call.1} parent=47 // pred_region
          %395 = dma.done [#allocation9], 512
        $region68: #{tpu_custom_call.1} parent=47 // pred_fallthru
          _
        // Predicated region
        $region69: #{tpu_custom_call.1} parent=47 // pred_check
          %p396 = pneg %p179
        $region70: #{tpu_custom_call.1} parent=47 // pred_check_branch
          %398 = sbr.rel (%p396) target = $region72
        $region71: #{tpu_custom_call.1} parent=47 // pred_region
          %399 = dma.done [#allocation12], 512
        $region72: #{tpu_custom_call.1} parent=47 // pred_fallthru
          _
        // Predicated region
        $region73: #{tpu_custom_call.1} parent=47 // pred_check
          %p400 = pneg %p200
        $region74: #{tpu_custom_call.1} parent=47 // pred_check_branch
          %402 = sbr.rel (%p400) target = $region76
        $region75: #{tpu_custom_call.1} parent=47 // pred_region
          %403 = dma.done [#allocation12], 512
        $region76: #{tpu_custom_call.1} parent=47 // pred_fallthru
          _
        %s404 = sand.u32 %s51, 1
        %s405 = scalar_lea.sflag [#allocation3], %s404
        %s406 = sand.u32 %s51, 1
        %s407 = smul.addr %s406, 8
        %s408 = scalar_lea.vmem [#allocation2], %s407
        %p409 = pneg %p64
        %p410 = pneg %p61
        %s411 = sand.u32 %s29, 1
        %s412 = scalar_lea.sflag [#allocation6], %s411
        %s413 = sand.u32 %s77, 1
        %s414 = smul.addr %s413, 8
        %s415 = scalar_lea.vmem [#allocation5], %s414
        %p416 = pneg %p90
        %p417 = pneg %p87
        %s418 = sand.u32 %s29, 1
        %s419 = scalar_lea.sflag [#allocation6], %s418
        %s420 = sand.u32 %s103, 1
        %s421 = smul.addr %s420, 8
        %s422 = scalar_lea.vmem [#allocation7], %s421
        %p423 = pneg %p116
        %p424 = pneg %p113
        %p425 = pneg %p137
        %p426 = pneg %p134
        %p427 = pneg %p158
        %p428 = pneg %p155
        %p429 = pneg %p179
        %p430 = pneg %p176
        %p431 = pneg %p200
        %p432 = pneg %p197
        %p433 = pneg %p228
        %p434 = pneg %p225
        %s435 = sand.u32 %s215, 1
        %s436 = scalar_lea.sflag [#allocation4], %s435
        %s437 = sand.u32 %s215, 1
        %s438 = smul.addr %s437, 8
        %s439 = scalar_lea.vmem [#allocation14], %s438
        %v441 = vld [vmem:[%s365] sm:$0xff]
        %v442 = vpack.c.bf16 %v441, %v441
        %v443 = vld [vmem:[%s374] sm:$0xff]
        %v444 = vpack.c.bf16 %v443, %v443
        %v445 = vld [vmem:[%s383] sm:$0xff]
        %v446 = vpack.c.bf16 %v445, %v445
        %v447 = vld [vmem:[#allocation8] sm:$0xff]
        %v448 = vld [vmem:[#allocation8 + $0x8] sm:$0xff]
        %v449 = vld [vmem:[#allocation8 + $0x10] sm:$0xff]
        %v450 = vld [vmem:[#allocation8 + $0x18] sm:$0xff]
        %v451 = vpack.c.bf16 %v448, %v447
        %v452 = vpack.c.bf16 %v450, %v449
        %v453 = vld [vmem:[#allocation10] sm:$0xff]
        %v454 = vld [vmem:[#allocation10 + $0x8] sm:$0xff]
        %v455 = vld [vmem:[#allocation10 + $0x10] sm:$0xff]
        %v456 = vld [vmem:[#allocation10 + $0x18] sm:$0xff]
        %v457 = vpack.c.bf16 %v454, %v453
        %v458 = vpack.c.bf16 %v456, %v455
        %v459 = vld [vmem:[#allocation11] sm:$0xff]
        %v460 = vld [vmem:[#allocation11 + $0x8] sm:$0xff]
        %v461 = vld [vmem:[#allocation11 + $0x10] sm:$0xff]
        %v462 = vld [vmem:[#allocation11 + $0x18] sm:$0xff]
        %v463 = vpack.c.bf16 %v460, %v459
        %v464 = vpack.c.bf16 %v462, %v461
        %v465 = vld [vmem:[#allocation13] sm:$0xff]
        %v466 = vld [vmem:[#allocation13 + $0x8] sm:$0xff]
        %v467 = vld [vmem:[#allocation13 + $0x10] sm:$0xff]
        %v468 = vld [vmem:[#allocation13 + $0x18] sm:$0xff]
        %v469 = vpack.c.bf16 %v466, %v465
        %v470 = vpack.c.bf16 %v468, %v467
        %vm471 = vcmask 261120
        %v473 = vsel %vm471, %v442, 0
        %475 = vmatprep.subr.bf16.mxu0 0
        %476 = vmatpush1.bf16.msra.mxu0 %v451
        %477 = vmatprep.subr.bf16.mxu0 0
        %478 = vmatpush1.bf16.msra.mxu0 %v452
        %479 = vmatprep.subr.bf16.mxu0 0
        %480 = vmatpush1.bf16.msra.mxu0 0
        %481 = vmatprep.subr.bf16.mxu0 0
        %482 = vmatpush1.bf16.msra.mxu0 0
        %483 = vmatprep.subr.bf16.mxu0 0
        %484 = vmatpush1.bf16.msra.mxu0 0
        %485 = vmatprep.subr.bf16.mxu0 0
        %486 = vmatpush1.bf16.msra.mxu0 0
        %487 = vmatprep.subr.bf16.mxu0 0
        %488 = vmatpush1.bf16.msra.mxu0 0
        %489 = vmatprep.subr.bf16.mxu0 0
        %490 = vmatpush1.bf16.msra.mxu0 0
        %491 = vmatprep.subr.bf16.mxu0 0
        %492 = vmatpush1.bf16.msra.mxu0 0
        %493 = vmatprep.subr.bf16.mxu0 0
        %494 = vmatpush1.bf16.msra.mxu0 0
        %495 = vmatprep.subr.bf16.mxu0 0
        %496 = vmatpush1.bf16.msra.mxu0 0
        %497 = vmatprep.subr.bf16.mxu0 0
        %498 = vmatpush1.bf16.msra.mxu0 0
        %499 = vmatprep.subr.bf16.mxu0 0
        %500 = vmatpush1.bf16.msra.mxu0 0
        %501 = vmatprep.subr.bf16.mxu0 0
        %502 = vmatpush1.bf16.msra.mxu0 0
        %503 = vmatprep.subr.bf16.mxu0 0
        %504 = vmatpush1.bf16.msra.mxu0 0
        %505 = vmatprep.subr.bf16.mxu0 0
        %506 = vmatpush1.bf16.msra.mxu0 0
        %507 = vmatprep.mubr.bf16.mxu0 0
        %508 = vmatmul.mubr.bf16.gmra.mrb[0].mxu0 %v473
        %v509 = vpop.f32.mrb[0].mxu0
        %v510 = vadd.f32 0.0, %v509
        %v511 = vpop.f32.mrb[0].mxu0
        %v512 = vpop.f32.mrb[0].mxu0
        %v513 = vpop.f32.mrb[0].mxu0
        %514 = vdwg.mxu0
        %v516 = vsel %vm471, %v444, 0
        %518 = vmatprep.subr.bf16.mxu0 0
        %519 = vmatpush1.bf16.msra.mxu0 %v457
        %520 = vmatprep.subr.bf16.mxu0 0
        %521 = vmatpush1.bf16.msra.mxu0 %v458
        %522 = vmatprep.subr.bf16.mxu0 0
        %523 = vmatpush1.bf16.msra.mxu0 0
        %524 = vmatprep.subr.bf16.mxu0 0
        %525 = vmatpush1.bf16.msra.mxu0 0
        %526 = vmatprep.subr.bf16.mxu0 0
        %527 = vmatpush1.bf16.msra.mxu0 0
        %528 = vmatprep.subr.bf16.mxu0 0
        %529 = vmatpush1.bf16.msra.mxu0 0
        %530 = vmatprep.subr.bf16.mxu0 0
        %531 = vmatpush1.bf16.msra.mxu0 0
        %532 = vmatprep.subr.bf16.mxu0 0
        %533 = vmatpush1.bf16.msra.mxu0 0
        %534 = vmatprep.subr.bf16.mxu0 0
        %535 = vmatpush1.bf16.msra.mxu0 0
        %536 = vmatprep.subr.bf16.mxu0 0
        %537 = vmatpush1.bf16.msra.mxu0 0
        %538 = vmatprep.subr.bf16.mxu0 0
        %539 = vmatpush1.bf16.msra.mxu0 0
        %540 = vmatprep.subr.bf16.mxu0 0
        %541 = vmatpush1.bf16.msra.mxu0 0
        %542 = vmatprep.subr.bf16.mxu0 0
        %543 = vmatpush1.bf16.msra.mxu0 0
        %544 = vmatprep.subr.bf16.mxu0 0
        %545 = vmatpush1.bf16.msra.mxu0 0
        %546 = vmatprep.subr.bf16.mxu0 0
        %547 = vmatpush1.bf16.msra.mxu0 0
        %548 = vmatprep.subr.bf16.mxu0 0
        %549 = vmatpush1.bf16.msra.mxu0 0
        %550 = vmatprep.mubr.bf16.mxu0 0
        %551 = vmatmul.mubr.bf16.gmra.mrb[0].mxu0 %v516
        %v552 = vpop.f32.mrb[0].mxu0
        %v553 = vadd.f32 0.0, %v552
        %v554 = vpop.f32.mrb[0].mxu0
        %v555 = vpop.f32.mrb[0].mxu0
        %v556 = vpop.f32.mrb[0].mxu0
        %557 = vdwg.mxu0
        %v559 = vsel %vm471, %v446, 0
        %561 = vmatprep.subr.bf16.mxu0 0
        %562 = vmatpush1.bf16.msra.mxu0 %v463
        %563 = vmatprep.subr.bf16.mxu0 0
        %564 = vmatpush1.bf16.msra.mxu0 %v464
        %565 = vmatprep.subr.bf16.mxu0 0
        %566 = vmatpush1.bf16.msra.mxu0 0
        %567 = vmatprep.subr.bf16.mxu0 0
        %568 = vmatpush1.bf16.msra.mxu0 0
        %569 = vmatprep.subr.bf16.mxu0 0
        %570 = vmatpush1.bf16.msra.mxu0 0
        %571 = vmatprep.subr.bf16.mxu0 0
        %572 = vmatpush1.bf16.msra.mxu0 0
        %573 = vmatprep.subr.bf16.mxu0 0
        %574 = vmatpush1.bf16.msra.mxu0 0
        %575 = vmatprep.subr.bf16.mxu0 0
        %576 = vmatpush1.bf16.msra.mxu0 0
        %577 = vmatprep.subr.bf16.mxu0 0
        %578 = vmatpush1.bf16.msra.mxu0 0
        %579 = vmatprep.subr.bf16.mxu0 0
        %580 = vmatpush1.bf16.msra.mxu0 0
        %581 = vmatprep.subr.bf16.mxu0 0
        %582 = vmatpush1.bf16.msra.mxu0 0
        %583 = vmatprep.subr.bf16.mxu0 0
        %584 = vmatpush1.bf16.msra.mxu0 0
        %585 = vmatprep.subr.bf16.mxu0 0
        %586 = vmatpush1.bf16.msra.mxu0 0
        %587 = vmatprep.subr.bf16.mxu0 0
        %588 = vmatpush1.bf16.msra.mxu0 0
        %589 = vmatprep.subr.bf16.mxu0 0
        %590 = vmatpush1.bf16.msra.mxu0 0
        %591 = vmatprep.subr.bf16.mxu0 0
        %592 = vmatpush1.bf16.msra.mxu0 0
        %593 = vmatprep.mubr.bf16.mxu0 0
        %594 = vmatmul.mubr.bf16.gmra.mrb[0].mxu0 %v559
        %v595 = vpop.f32.mrb[0].mxu0
        %v596 = vadd.f32 0.0, %v595
        %v597 = vpop.f32.mrb[0].mxu0
        %v598 = vpop.f32.mrb[0].mxu0
        %v599 = vpop.f32.mrb[0].mxu0
        %600 = vdwg.mxu0
        %v601 = vpack.c.bf16 %v510, %v510
        %v602 = vpack.c.bf16 %v553, %v553
        %v603 = vpack.c.bf16 %v596, %v596
        %vm604 = vcmask 64512
        %v606 = vsel %vm604, %v601, 0
        %v609 = vsel %vm604, %v602, 0
        %611 = vmatprep.subr.bf16.mxu0 0
        %612 = vmatpush1.bf16.xpose.msra.mxu0 %v609
        %613 = vmatprep.subr.bf16.mxu0 0
        %614 = vmatpush1.bf16.xpose.msra.mxu0 0
        %615 = vmatprep.subr.bf16.mxu0 0
        %616 = vmatpush1.bf16.xpose.msra.mxu0 0
        %617 = vmatprep.subr.bf16.mxu0 0
        %618 = vmatpush1.bf16.xpose.msra.mxu0 0
        %619 = vmatprep.subr.bf16.mxu0 0
        %620 = vmatpush1.bf16.xpose.msra.mxu0 0
        %621 = vmatprep.subr.bf16.mxu0 0
        %622 = vmatpush1.bf16.xpose.msra.mxu0 0
        %623 = vmatprep.subr.bf16.mxu0 0
        %624 = vmatpush1.bf16.xpose.msra.mxu0 0
        %625 = vmatprep.subr.bf16.mxu0 0
        %626 = vmatpush1.bf16.xpose.msra.mxu0 0
        %627 = vmatprep.subr.bf16.mxu0 0
        %628 = vmatpush1.bf16.xpose.msra.mxu0 0
        %629 = vmatprep.subr.bf16.mxu0 0
        %630 = vmatpush1.bf16.xpose.msra.mxu0 0
        %631 = vmatprep.subr.bf16.mxu0 0
        %632 = vmatpush1.bf16.xpose.msra.mxu0 0
        %633 = vmatprep.subr.bf16.mxu0 0
        %634 = vmatpush1.bf16.xpose.msra.mxu0 0
        %635 = vmatprep.subr.bf16.mxu0 0
        %636 = vmatpush1.bf16.xpose.msra.mxu0 0
        %637 = vmatprep.subr.bf16.mxu0 0
        %638 = vmatpush1.bf16.xpose.msra.mxu0 0
        %639 = vmatprep.subr.bf16.mxu0 0
        %640 = vmatpush1.bf16.xpose.msra.mxu0 0
        %641 = vmatprep.subr.bf16.mxu0 0
        %642 = vmatpush1.bf16.xpose.msra.mxu0 0
        %643 = vmatprep.mubr.bf16.mxu0 0
        %644 = vmatmul.mubr.bf16.gmra.mrb[0].mxu0 %v606
        %v645 = vpop.f32.mrb[0].mxu0
        %v646 = vadd.f32 0.0, %v645
        %v647 = vpop.f32.mrb[0].mxu0
        %v648 = vpop.f32.mrb[0].mxu0
        %v649 = vpop.f32.mrb[0].mxu0
        %650 = vdwg.mxu0
        %v651 = vmul.f32 %v646, 0.35355338
        %v652 = vsel %vm604, %v651, -inf
        %653 = vmax.xlane.f32.xlu0 %v652
        %v654 = vpop.xlane.xlu0 %653
        %v655 = vsub.f32 %v651, %v654
        %v656 = vmul.f32 %v655, 1.442695
        %v657 = vpow.pop %v656
        %v658 = vsel %vm604, %v657, 0.0
        %659 = vadd.xlane.f32.xlu0 %v658
        %v660 = vpop.xlane.xlu0 %659
        %v661 = vrcp.pop %v660
        %v662 = vmul.f32 %v657, %v661
        %v663 = vpack.c.bf16 %v662, %v662
        %v665 = vsel %vm604, %v663, 0
        %vm667 = vcmask 1043456
        %v669 = vsel %vm667, %v603, 0
        %671 = vmatprep.subr.bf16.mxu0 0
        %672 = vmatpush1.bf16.msra.mxu0 %v669
        %673 = vmatprep.subr.bf16.mxu0 0
        %674 = vmatpush1.bf16.msra.mxu0 0
        %675 = vmatprep.subr.bf16.mxu0 0
        %676 = vmatpush1.bf16.msra.mxu0 0
        %677 = vmatprep.subr.bf16.mxu0 0
        %678 = vmatpush1.bf16.msra.mxu0 0
        %679 = vmatprep.subr.bf16.mxu0 0
        %680 = vmatpush1.bf16.msra.mxu0 0
        %681 = vmatprep.subr.bf16.mxu0 0
        %682 = vmatpush1.bf16.msra.mxu0 0
        %683 = vmatprep.subr.bf16.mxu0 0
        %684 = vmatpush1.bf16.msra.mxu0 0
        %685 = vmatprep.subr.bf16.mxu0 0
        %686 = vmatpush1.bf16.msra.mxu0 0
        %687 = vmatprep.subr.bf16.mxu0 0
        %688 = vmatpush1.bf16.msra.mxu0 0
        %689 = vmatprep.subr.bf16.mxu0 0
        %690 = vmatpush1.bf16.msra.mxu0 0
        %691 = vmatprep.subr.bf16.mxu0 0
        %692 = vmatpush1.bf16.msra.mxu0 0
        %693 = vmatprep.subr.bf16.mxu0 0
        %694 = vmatpush1.bf16.msra.mxu0 0
        %695 = vmatprep.subr.bf16.mxu0 0
        %696 = vmatpush1.bf16.msra.mxu0 0
        %697 = vmatprep.subr.bf16.mxu0 0
        %698 = vmatpush1.bf16.msra.mxu0 0
        %699 = vmatprep.subr.bf16.mxu0 0
        %700 = vmatpush1.bf16.msra.mxu0 0
        %701 = vmatprep.subr.bf16.mxu0 0
        %702 = vmatpush1.bf16.msra.mxu0 0
        %703 = vmatprep.mubr.bf16.mxu0 0
        %704 = vmatmul.mubr.bf16.gmra.mrb[0].mxu0 %v665
        %v705 = vpop.f32.mrb[0].mxu0
        %v706 = vadd.f32 0.0, %v705
        %v707 = vpop.f32.mrb[0].mxu0
        %v708 = vpop.f32.mrb[0].mxu0
        %v709 = vpop.f32.mrb[0].mxu0
        %710 = vdwg.mxu0
        %712 = vrot.lane.b32.xlu0 %v601, 120
        %v713 = vpop.permute.xlu0 %712
        %715 = vrot.lane.b32.xlu0 %v602, 120
        %v716 = vpop.permute.xlu0 %715
        %v718 = vsel %vm604, %v713, 0
        %v721 = vsel %vm604, %v716, 0
        %723 = vmatprep.subr.bf16.mxu0 0
        %724 = vmatpush1.bf16.xpose.msra.mxu0 %v721
        %725 = vmatprep.subr.bf16.mxu0 0
        %726 = vmatpush1.bf16.xpose.msra.mxu0 0
        %727 = vmatprep.subr.bf16.mxu0 0
        %728 = vmatpush1.bf16.xpose.msra.mxu0 0
        %729 = vmatprep.subr.bf16.mxu0 0
        %730 = vmatpush1.bf16.xpose.msra.mxu0 0
        %731 = vmatprep.subr.bf16.mxu0 0
        %732 = vmatpush1.bf16.xpose.msra.mxu0 0
        %733 = vmatprep.subr.bf16.mxu0 0
        %734 = vmatpush1.bf16.xpose.msra.mxu0 0
        %735 = vmatprep.subr.bf16.mxu0 0
        %736 = vmatpush1.bf16.xpose.msra.mxu0 0
        %737 = vmatprep.subr.bf16.mxu0 0
        %738 = vmatpush1.bf16.xpose.msra.mxu0 0
        %739 = vmatprep.subr.bf16.mxu0 0
        %740 = vmatpush1.bf16.xpose.msra.mxu0 0
        %741 = vmatprep.subr.bf16.mxu0 0
        %742 = vmatpush1.bf16.xpose.msra.mxu0 0
        %743 = vmatprep.subr.bf16.mxu0 0
        %744 = vmatpush1.bf16.xpose.msra.mxu0 0
        %745 = vmatprep.subr.bf16.mxu0 0
        %746 = vmatpush1.bf16.xpose.msra.mxu0 0
        %747 = vmatprep.subr.bf16.mxu0 0
        %748 = vmatpush1.bf16.xpose.msra.mxu0 0
        %749 = vmatprep.subr.bf16.mxu0 0
        %750 = vmatpush1.bf16.xpose.msra.mxu0 0
        %751 = vmatprep.subr.bf16.mxu0 0
        %752 = vmatpush1.bf16.xpose.msra.mxu0 0
        %753 = vmatprep.subr.bf16.mxu0 0
        %754 = vmatpush1.bf16.xpose.msra.mxu0 0
        %755 = vmatprep.mubr.bf16.mxu0 0
        %756 = vmatmul.mubr.bf16.gmra.mrb[0].mxu0 %v718
        %v757 = vpop.f32.mrb[0].mxu0
        %v758 = vadd.f32 0.0, %v757
        %v759 = vpop.f32.mrb[0].mxu0
        %v760 = vpop.f32.mrb[0].mxu0
        %v761 = vpop.f32.mrb[0].mxu0
        %762 = vdwg.mxu0
        %v763 = vmul.f32 %v758, 0.35355338
        %v764 = vsel %vm604, %v763, -inf
        %765 = vmax.xlane.f32.xlu0 %v764
        %v766 = vpop.xlane.xlu0 %765
        %v767 = vsub.f32 %v763, %v766
        %v768 = vmul.f32 %v767, 1.442695
        %v769 = vpow.pop %v768
        %v770 = vsel %vm604, %v769, 0.0
        %771 = vadd.xlane.f32.xlu0 %v770
        %v772 = vpop.xlane.xlu0 %771
        %v773 = vrcp.pop %v772
        %v774 = vmul.f32 %v769, %v773
        %v775 = vpack.c.bf16 %v774, %v774
        %777 = vrot.lane.b32.xlu0 %v603, 120
        %v778 = vpop.permute.xlu0 %777
        %v780 = vsel %vm604, %v775, 0
        %v783 = vsel %vm667, %v778, 0
        %785 = vmatprep.subr.bf16.mxu0 0
        %786 = vmatpush1.bf16.msra.mxu0 %v783
        %787 = vmatprep.subr.bf16.mxu0 0
        %788 = vmatpush1.bf16.msra.mxu0 0
        %789 = vmatprep.subr.bf16.mxu0 0
        %790 = vmatpush1.bf16.msra.mxu0 0
        %791 = vmatprep.subr.bf16.mxu0 0
        %792 = vmatpush1.bf16.msra.mxu0 0
        %793 = vmatprep.subr.bf16.mxu0 0
        %794 = vmatpush1.bf16.msra.mxu0 0
        %795 = vmatprep.subr.bf16.mxu0 0
        %796 = vmatpush1.bf16.msra.mxu0 0
        %797 = vmatprep.subr.bf16.mxu0 0
        %798 = vmatpush1.bf16.msra.mxu0 0
        %799 = vmatprep.subr.bf16.mxu0 0
        %800 = vmatpush1.bf16.msra.mxu0 0
        %801 = vmatprep.subr.bf16.mxu0 0
        %802 = vmatpush1.bf16.msra.mxu0 0
        %803 = vmatprep.subr.bf16.mxu0 0
        %804 = vmatpush1.bf16.msra.mxu0 0
        %805 = vmatprep.subr.bf16.mxu0 0
        %806 = vmatpush1.bf16.msra.mxu0 0
        %807 = vmatprep.subr.bf16.mxu0 0
        %808 = vmatpush1.bf16.msra.mxu0 0
        %809 = vmatprep.subr.bf16.mxu0 0
        %810 = vmatpush1.bf16.msra.mxu0 0
        %811 = vmatprep.subr.bf16.mxu0 0
        %812 = vmatpush1.bf16.msra.mxu0 0
        %813 = vmatprep.subr.bf16.mxu0 0
        %814 = vmatpush1.bf16.msra.mxu0 0
        %815 = vmatprep.subr.bf16.mxu0 0
        %816 = vmatpush1.bf16.msra.mxu0 0
        %817 = vmatprep.mubr.bf16.mxu0 0
        %818 = vmatmul.mubr.bf16.gmra.mrb[0].mxu0 %v780
        %v819 = vpop.f32.mrb[0].mxu0
        %v820 = vadd.f32 0.0, %v819
        %v821 = vpop.f32.mrb[0].mxu0
        %v822 = vpop.f32.mrb[0].mxu0
        %v823 = vpop.f32.mrb[0].mxu0
        %824 = vdwg.mxu0
        %825 = vrot.lane.b32.xlu0 %v601, 112
        %v826 = vpop.permute.xlu0 %825
        %827 = vrot.lane.b32.xlu0 %v602, 112
        %v828 = vpop.permute.xlu0 %827
        %v830 = vsel %vm604, %v826, 0
        %v833 = vsel %vm604, %v828, 0
        %835 = vmatprep.subr.bf16.mxu0 0
        %836 = vmatpush1.bf16.xpose.msra.mxu0 %v833
        %837 = vmatprep.subr.bf16.mxu0 0
        %838 = vmatpush1.bf16.xpose.msra.mxu0 0
        %839 = vmatprep.subr.bf16.mxu0 0
        %840 = vmatpush1.bf16.xpose.msra.mxu0 0
        %841 = vmatprep.subr.bf16.mxu0 0
        %842 = vmatpush1.bf16.xpose.msra.mxu0 0
        %843 = vmatprep.subr.bf16.mxu0 0
        %844 = vmatpush1.bf16.xpose.msra.mxu0 0
        %845 = vmatprep.subr.bf16.mxu0 0
        %846 = vmatpush1.bf16.xpose.msra.mxu0 0
        %847 = vmatprep.subr.bf16.mxu0 0
        %848 = vmatpush1.bf16.xpose.msra.mxu0 0
        %849 = vmatprep.subr.bf16.mxu0 0
        %850 = vmatpush1.bf16.xpose.msra.mxu0 0
        %851 = vmatprep.subr.bf16.mxu0 0
        %852 = vmatpush1.bf16.xpose.msra.mxu0 0
        %853 = vmatprep.subr.bf16.mxu0 0
        %854 = vmatpush1.bf16.xpose.msra.mxu0 0
        %855 = vmatprep.subr.bf16.mxu0 0
        %856 = vmatpush1.bf16.xpose.msra.mxu0 0
        %857 = vmatprep.subr.bf16.mxu0 0
        %858 = vmatpush1.bf16.xpose.msra.mxu0 0
        %859 = vmatprep.subr.bf16.mxu0 0
        %860 = vmatpush1.bf16.xpose.msra.mxu0 0
        %861 = vmatprep.subr.bf16.mxu0 0
        %862 = vmatpush1.bf16.xpose.msra.mxu0 0
        %863 = vmatprep.subr.bf16.mxu0 0
        %864 = vmatpush1.bf16.xpose.msra.mxu0 0
        %865 = vmatprep.subr.bf16.mxu0 0
        %866 = vmatpush1.bf16.xpose.msra.mxu0 0
        %867 = vmatprep.mubr.bf16.mxu0 0
        %868 = vmatmul.mubr.bf16.gmra.mrb[0].mxu0 %v830
        %v869 = vpop.f32.mrb[0].mxu0
        %v870 = vadd.f32 0.0, %v869
        %v871 = vpop.f32.mrb[0].mxu0
        %v872 = vpop.f32.mrb[0].mxu0
        %v873 = vpop.f32.mrb[0].mxu0
        %874 = vdwg.mxu0
        %v875 = vmul.f32 %v870, 0.35355338
        %v876 = vsel %vm604, %v875, -inf
        %877 = vmax.xlane.f32.xlu0 %v876
        %v878 = vpop.xlane.xlu0 %877
        %v879 = vsub.f32 %v875, %v878
        %v880 = vmul.f32 %v879, 1.442695
        %v881 = vpow.pop %v880
        %v882 = vsel %vm604, %v881, 0.0
        %883 = vadd.xlane.f32.xlu0 %v882
        %v884 = vpop.xlane.xlu0 %883
        %v885 = vrcp.pop %v884
        %v886 = vmul.f32 %v881, %v885
        %v887 = vpack.c.bf16 %v886, %v886
        %888 = vrot.lane.b32.xlu0 %v603, 112
        %v889 = vpop.permute.xlu0 %888
        %v891 = vsel %vm604, %v887, 0
        %v894 = vsel %vm667, %v889, 0
        %896 = vmatprep.subr.bf16.mxu0 0
        %897 = vmatpush1.bf16.msra.mxu0 %v894
        %898 = vmatprep.subr.bf16.mxu0 0
        %899 = vmatpush1.bf16.msra.mxu0 0
        %900 = vmatprep.subr.bf16.mxu0 0
        %901 = vmatpush1.bf16.msra.mxu0 0
        %902 = vmatprep.subr.bf16.mxu0 0
        %903 = vmatpush1.bf16.msra.mxu0 0
        %904 = vmatprep.subr.bf16.mxu0 0
        %905 = vmatpush1.bf16.msra.mxu0 0
        %906 = vmatprep.subr.bf16.mxu0 0
        %907 = vmatpush1.bf16.msra.mxu0 0
        %908 = vmatprep.subr.bf16.mxu0 0
        %909 = vmatpush1.bf16.msra.mxu0 0
        %910 = vmatprep.subr.bf16.mxu0 0
        %911 = vmatpush1.bf16.msra.mxu0 0
        %912 = vmatprep.subr.bf16.mxu0 0
        %913 = vmatpush1.bf16.msra.mxu0 0
        %914 = vmatprep.subr.bf16.mxu0 0
        %915 = vmatpush1.bf16.msra.mxu0 0
        %916 = vmatprep.subr.bf16.mxu0 0
        %917 = vmatpush1.bf16.msra.mxu0 0
        %918 = vmatprep.subr.bf16.mxu0 0
        %919 = vmatpush1.bf16.msra.mxu0 0
        %920 = vmatprep.subr.bf16.mxu0 0
        %921 = vmatpush1.bf16.msra.mxu0 0
        %922 = vmatprep.subr.bf16.mxu0 0
        %923 = vmatpush1.bf16.msra.mxu0 0
        %924 = vmatprep.subr.bf16.mxu0 0
        %925 = vmatpush1.bf16.msra.mxu0 0
        %926 = vmatprep.subr.bf16.mxu0 0
        %927 = vmatpush1.bf16.msra.mxu0 0
        %928 = vmatprep.mubr.bf16.mxu0 0
        %929 = vmatmul.mubr.bf16.gmra.mrb[0].mxu0 %v891
        %v930 = vpop.f32.mrb[0].mxu0
        %v931 = vadd.f32 0.0, %v930
        %v932 = vpop.f32.mrb[0].mxu0
        %v933 = vpop.f32.mrb[0].mxu0
        %v934 = vpop.f32.mrb[0].mxu0
        %935 = vdwg.mxu0
        %936 = vrot.lane.b32.xlu0 %v601, 104
        %v937 = vpop.permute.xlu0 %936
        %938 = vrot.lane.b32.xlu0 %v602, 104
        %v939 = vpop.permute.xlu0 %938
        %v941 = vsel %vm604, %v937, 0
        %v944 = vsel %vm604, %v939, 0
        %946 = vmatprep.subr.bf16.mxu0 0
        %947 = vmatpush1.bf16.xpose.msra.mxu0 %v944
        %948 = vmatprep.subr.bf16.mxu0 0
        %949 = vmatpush1.bf16.xpose.msra.mxu0 0
        %950 = vmatprep.subr.bf16.mxu0 0
        %951 = vmatpush1.bf16.xpose.msra.mxu0 0
        %952 = vmatprep.subr.bf16.mxu0 0
        %953 = vmatpush1.bf16.xpose.msra.mxu0 0
        %954 = vmatprep.subr.bf16.mxu0 0
        %955 = vmatpush1.bf16.xpose.msra.mxu0 0
        %956 = vmatprep.subr.bf16.mxu0 0
        %957 = vmatpush1.bf16.xpose.msra.mxu0 0
        %958 = vmatprep.subr.bf16.mxu0 0
        %959 = vmatpush1.bf16.xpose.msra.mxu0 0
        %960 = vmatprep.subr.bf16.mxu0 0
        %961 = vmatpush1.bf16.xpose.msra.mxu0 0
        %962 = vmatprep.subr.bf16.mxu0 0
        %963 = vmatpush1.bf16.xpose.msra.mxu0 0
        %964 = vmatprep.subr.bf16.mxu0 0
        %965 = vmatpush1.bf16.xpose.msra.mxu0 0
        %966 = vmatprep.subr.bf16.mxu0 0
        %967 = vmatpush1.bf16.xpose.msra.mxu0 0
        %968 = vmatprep.subr.bf16.mxu0 0
        %969 = vmatpush1.bf16.xpose.msra.mxu0 0
        %970 = vmatprep.subr.bf16.mxu0 0
        %971 = vmatpush1.bf16.xpose.msra.mxu0 0
        %972 = vmatprep.subr.bf16.mxu0 0
        %973 = vmatpush1.bf16.xpose.msra.mxu0 0
        %974 = vmatprep.subr.bf16.mxu0 0
        %975 = vmatpush1.bf16.xpose.msra.mxu0 0
        %976 = vmatprep.subr.bf16.mxu0 0
        %977 = vmatpush1.bf16.xpose.msra.mxu0 0
        %978 = vmatprep.mubr.bf16.mxu0 0
        %979 = vmatmul.mubr.bf16.gmra.mrb[0].mxu0 %v941
        %v980 = vpop.f32.mrb[0].mxu0
        %v981 = vadd.f32 0.0, %v980
        %v982 = vpop.f32.mrb[0].mxu0
        %v983 = vpop.f32.mrb[0].mxu0
        %v984 = vpop.f32.mrb[0].mxu0
        %985 = vdwg.mxu0
        %v986 = vmul.f32 %v981, 0.35355338
        %v987 = vsel %vm604, %v986, -inf
        %988 = vmax.xlane.f32.xlu0 %v987
        %v989 = vpop.xlane.xlu0 %988
        %v990 = vsub.f32 %v986, %v989
        %v991 = vmul.f32 %v990, 1.442695
        %v992 = vpow.pop %v991
        %v993 = vsel %vm604, %v992, 0.0
        %994 = vadd.xlane.f32.xlu0 %v993
        %v995 = vpop.xlane.xlu0 %994
        %v996 = vrcp.pop %v995
        %v997 = vmul.f32 %v992, %v996
        %v998 = vpack.c.bf16 %v997, %v997
        %999 = vrot.lane.b32.xlu0 %v603, 104
        %v1000 = vpop.permute.xlu0 %999
        %v1002 = vsel %vm604, %v998, 0
        %v1005 = vsel %vm667, %v1000, 0
        %1007 = vmatprep.subr.bf16.mxu0 0
        %1008 = vmatpush1.bf16.msra.mxu0 %v1005
        %1009 = vmatprep.subr.bf16.mxu0 0
        %1010 = vmatpush1.bf16.msra.mxu0 0
        %1011 = vmatprep.subr.bf16.mxu0 0
        %1012 = vmatpush1.bf16.msra.mxu0 0
        %1013 = vmatprep.subr.bf16.mxu0 0
        %1014 = vmatpush1.bf16.msra.mxu0 0
        %1015 = vmatprep.subr.bf16.mxu0 0
        %1016 = vmatpush1.bf16.msra.mxu0 0
        %1017 = vmatprep.subr.bf16.mxu0 0
        %1018 = vmatpush1.bf16.msra.mxu0 0
        %1019 = vmatprep.subr.bf16.mxu0 0
        %1020 = vmatpush1.bf16.msra.mxu0 0
        %1021 = vmatprep.subr.bf16.mxu0 0
        %1022 = vmatpush1.bf16.msra.mxu0 0
        %1023 = vmatprep.subr.bf16.mxu0 0
        %1024 = vmatpush1.bf16.msra.mxu0 0
        %1025 = vmatprep.subr.bf16.mxu0 0
        %1026 = vmatpush1.bf16.msra.mxu0 0
        %1027 = vmatprep.subr.bf16.mxu0 0
        %1028 = vmatpush1.bf16.msra.mxu0 0
        %1029 = vmatprep.subr.bf16.mxu0 0
        %1030 = vmatpush1.bf16.msra.mxu0 0
        %1031 = vmatprep.subr.bf16.mxu0 0
        %1032 = vmatpush1.bf16.msra.mxu0 0
        %1033 = vmatprep.subr.bf16.mxu0 0
        %1034 = vmatpush1.bf16.msra.mxu0 0
        %1035 = vmatprep.subr.bf16.mxu0 0
        %1036 = vmatpush1.bf16.msra.mxu0 0
        %1037 = vmatprep.subr.bf16.mxu0 0
        %1038 = vmatpush1.bf16.msra.mxu0 0
        %1039 = vmatprep.mubr.bf16.mxu0 0
        %1040 = vmatmul.mubr.bf16.gmra.mrb[0].mxu0 %v1002
        %v1041 = vpop.f32.mrb[0].mxu0
        %v1042 = vadd.f32 0.0, %v1041
        %v1043 = vpop.f32.mrb[0].mxu0
        %v1044 = vpop.f32.mrb[0].mxu0
        %v1045 = vpop.f32.mrb[0].mxu0
        %1046 = vdwg.mxu0
        %1048 = vrot.lane.b32.xlu0 %v820, 8
        %v1049 = vpop.permute.xlu0 %1048
        %1052 = vrot.lane.b32.xlu0 %v931, 16
        %v1053 = vpop.permute.xlu0 %1052
        %1056 = vrot.lane.b32.xlu0 %v1042, 24
        %v1057 = vpop.permute.xlu0 %1056
        %v1059 = vsel %vm604, %v706, %v1049
        %vm1060 = vcmask 130048
        %v1061 = vsel %vm1060, %v1059, %v1053
        %vm1062 = vcmask 195584
        %v1063 = vsel %vm1062, %v1061, %v1057
        %v1064 = vpack.c.bf16 %v1063, %v1063
        %v1066 = vsel %vm471, %v1064, 0
        %1068 = vmatprep.subr.bf16.mxu0 0
        %1069 = vmatpush1.bf16.msra.mxu0 %v469
        %1070 = vmatprep.subr.bf16.mxu0 0
        %1071 = vmatpush1.bf16.msra.mxu0 %v470
        %1072 = vmatprep.subr.bf16.mxu0 0
        %1073 = vmatpush1.bf16.msra.mxu0 0
        %1074 = vmatprep.subr.bf16.mxu0 0
        %1075 = vmatpush1.bf16.msra.mxu0 0
        %1076 = vmatprep.subr.bf16.mxu0 0
        %1077 = vmatpush1.bf16.msra.mxu0 0
        %1078 = vmatprep.subr.bf16.mxu0 0
        %1079 = vmatpush1.bf16.msra.mxu0 0
        %1080 = vmatprep.subr.bf16.mxu0 0
        %1081 = vmatpush1.bf16.msra.mxu0 0
        %1082 = vmatprep.subr.bf16.mxu0 0
        %1083 = vmatpush1.bf16.msra.mxu0 0
        %1084 = vmatprep.subr.bf16.mxu0 0
        %1085 = vmatpush1.bf16.msra.mxu0 0
        %1086 = vmatprep.subr.bf16.mxu0 0
        %1087 = vmatpush1.bf16.msra.mxu0 0
        %1088 = vmatprep.subr.bf16.mxu0 0
        %1089 = vmatpush1.bf16.msra.mxu0 0
        %1090 = vmatprep.subr.bf16.mxu0 0
        %1091 = vmatpush1.bf16.msra.mxu0 0
        %1092 = vmatprep.subr.bf16.mxu0 0
        %1093 = vmatpush1.bf16.msra.mxu0 0
        %1094 = vmatprep.subr.bf16.mxu0 0
        %1095 = vmatpush1.bf16.msra.mxu0 0
        %1096 = vmatprep.subr.bf16.mxu0 0
        %1097 = vmatpush1.bf16.msra.mxu0 0
        %1098 = vmatprep.subr.bf16.mxu0 0
        %1099 = vmatpush1.bf16.msra.mxu0 0
        %1100 = vmatprep.mubr.bf16.mxu0 0
        %1101 = vmatmul.mubr.bf16.gmra.mrb[0].mxu0 %v1066
        %v1102 = vpop.f32.mrb[0].mxu0
        %v1103 = vadd.f32 0.0, %v1102
        %v1104 = vpop.f32.mrb[0].mxu0
        %v1105 = vpop.f32.mrb[0].mxu0
        %v1106 = vpop.f32.mrb[0].mxu0
        %1107 = vdwg.mxu0
        %1108 = vst.msk [vmem:[%s439] sm:$0xff] %vm471, %v1103
        %s1109 = sand.u32 %s215, 1
        %s1110 = scalar_lea.sflag [#allocation4], %s1109
        %s1111 = sand.u32 %s215, 1
        %s1112 = smul.addr %s1111, 8
        %s1113 = scalar_lea.vmem [#allocation14], %s1112
        // Predicated region
        $region77: #{tpu_custom_call.1} parent=47 // pred_check
          %p1114 = pneg %p225
        $region78: #{tpu_custom_call.1} parent=47 // pred_check_branch
          %1116 = sbr.rel (%p1114) target = $region80
        $region79: #{tpu_custom_call.1} parent=47 // pred_region
          %s1118 = ssub.s32 128, 128
          %1119 = vsyncadd %s1110, %s1118
          %s1120 = sadd.s32 %s34, %s33
          %s1121 = smul.addr %s1120, 128
          %s1122 = scalar_lea.hbm %s7, %s1121
          %s1124 = sshll.u32 %s1113, 4
          %s1125 = int_to_ptr.vmem [resolvable:$true] %s1124
          %1127 = dma.vmem_to_hbm [thread:$0]  %s1125, 128, %s1122, %s1110
        $region80: #{tpu_custom_call.1} parent=47 // pred_fallthru
          _
      $region48: #{tpu_custom_call.1} parent=5 // pred_fallthru
        _
      %p1128 = scmp.le.s32.totalorder 2, %s24
      // Predicated region
      $region81: #{tpu_custom_call.1} parent=5 // pred_check
        %p1129 = pneg %p1128
      $region82: #{tpu_custom_call.1} parent=5 // pred_check_branch
        %1131 = sbr.rel (%p1129) target = $region84
      $region83: #{tpu_custom_call.1} parent=5 // pred_region
        %s1132 = ssub.s32 %s24, 2
        // Predicated region
        $region85: #{tpu_custom_call.1} parent=83 // pred_check
          %p1133 = pneg %p231
        $region86: #{tpu_custom_call.1} parent=83 // pred_check_branch
          %1135 = sbr.rel (%p1133) target = $region88
        $region87: #{tpu_custom_call.1} parent=83 // pred_region
          %s1136 = sand.u32 %s216, 1
          %s1137 = scalar_lea.sflag [#allocation4], %s1136
          %s1138 = sand.u32 %s216, 1
          %s1139 = smul.addr %s1138, 8
          %s1140 = scalar_lea.vmem [#allocation14], %s1139
          %1141 = dma.done %s1137, 128
        $region88: #{tpu_custom_call.1} parent=83 // pred_fallthru
          _
      $region84: #{tpu_custom_call.1} parent=5 // pred_fallthru
        _
    $region6: #{tpu_custom_call.1} parent=1 // loop_footer
      %s28 = sadd.s32 1, %s24
    $region7: #{tpu_custom_call.1} parent=1 // loop_footer_branch
      %23 = sbr.rel target = $region3
    $region8: #{tpu_custom_call.1} parent=1 // loop_exit
      _
    %1142 = vsyncpa [#allocation3], 1
    %s1143 = scalar_lea.sflag [#allocation3], 1
    %1144 = vsyncpa %s1143, 1
    %1145 = vsyncpa [#allocation6], 1
    %s1146 = scalar_lea.sflag [#allocation6], 1
    %1147 = vsyncpa %s1146, 1
    %1148 = vsyncpa [#allocation9], 1
    %1149 = vsyncpa [#allocation12], 1
    %1150 = vsyncpa [#allocation4], 1
    %s1151 = scalar_lea.sflag [#allocation4], 1
    %1152 = vsyncpa %s1151, 1

</llo_original>
